<compile_context>
chip_gen: v5e
topology: v5e:2x2
jax: 0.10.0
libtpu: 0.0.40
codegen_flags: <defaults>
</compile_context>

<pallas_src>
import jax
import jax.numpy as jnp
from jax.experimental import pallas as pl
from jax.experimental.pallas import tpu as pltpu


def _round_up(x, m):
    return ((x + m - 1) // m) * m


def _choose_vocab_tile(vp, hp):
    """Largest multiple-of-128 tile dividing vp; double-buffered bf16 tile <= ~16 MiB."""
    budget = 16 * 1024 * 1024
    cap = max(128, min(8192, (budget // (2 * 2 * hp)) // 128 * 128))
    tn = min(vp, cap)
    while vp % tn:
        tn -= 128
    return tn


def _vmem_limit(nbytes, lo=4 << 20, hi=48 << 20):
    # Cap at 48 MiB: leaves headroom on v7x's 64 MiB physical VMEM per TensorCore.
    return int(min(max(nbytes, lo), hi))


# --------------------------------------------------------------------------------------
# Kernel A: sequential LSTM recurrence.  Single grid step; x-side gate matmul is batched
# over all T steps; only h_prev @ W_hh^T stays inside the per-token loop.
# --------------------------------------------------------------------------------------
def _make_recurrence_kernel(T):
    def kernel(x_ref,        # (Tp, Hp)   bf16 embedding rows for all T tokens (padded)
               wih_ref,      # (Hp, 4Hp)  bf16 W_ih^T (per-gate lane padded)
               whh_ref,      # (Hp, 4Hp)  bf16 W_hh^T (per-gate lane padded)
               bg_ref,       # (1, 4Hp)   f32  b_ih + b_hh
               h0_ref,       # (1, Hp)    f32  initial hidden state
               c0_ref,       # (1, Hp)    f32  initial cell state
               hall_ref,     # (Tp, Hp)   f32  hidden state for every step (output)
               hT_ref,       # (1, Hp)    f32  final hidden state (output)
               cT_ref,       # (1, Hp)    f32  final cell state   (output)
               xg_ref):      # (Tp, 4Hp)  f32  scratch: x-side gate pre-activations
        # embedding -> relu -> x @ W_ih^T + b, hoisted out of the recurrence:
        # one well-shaped (Tp, Hp) @ (Hp, 4Hp) MXU matmul for all T steps.
        x = jnp.maximum(x_ref[...], 0.0).astype(jnp.bfloat16)
        xg_ref[...] = (jnp.dot(x, wih_ref[...], preferred_element_type=jnp.float32)
                       + bg_ref[...])

        # Padded rows of hall stay zero (their logits are sliced off in the wrapper).
        hall_ref[...] = jnp.zeros_like(hall_ref)

        whh = whh_ref[...]

        def step(t, carry):
            h_prev, c_prev = carry                              # (1, Hp) f32 each
            Hp = h_prev.shape[-1]
            gates = (xg_ref[pl.ds(t, 1), :]
                     + jnp.dot(h_prev.astype(jnp.bfloat16), whh,
                               preferred_element_type=jnp.float32))   # (1, 4Hp) f32
            i_g = jax.nn.sigmoid(gates[:, 0 * Hp:1 * Hp])
            f_g = jax.nn.sigmoid(gates[:, 1 * Hp:2 * Hp])
            g_g = jnp.tanh(gates[:, 2 * Hp:3 * Hp])
            o_g = jax.nn.sigmoid(gates[:, 3 * Hp:4 * Hp])
            c_new = f_g * c_prev + i_g * g_g
            h_new = o_g * jnp.tanh(c_new)
            hall_ref[pl.ds(t, 1), :] = h_new
            return (h_new, c_new)

        hT, cT = jax.lax.fori_loop(0, T, step, (h0_ref[...], c0_ref[...]), unroll=True)
        hT_ref[...] = hT
        cT_ref[...] = cT

    return kernel


# --------------------------------------------------------------------------------------
# Kernel B: batched output projection, tiled over the vocab axis.  Each W_out tile is
# loaded from HBM exactly once; the matmul is (Tp, Hp) @ (Hp, TN).
# --------------------------------------------------------------------------------------
def _projection_kernel(hall_ref,     # (Tp, Hp)  f32  hidden states for all steps
                       wout_ref,     # (Hp, TN)  bf16 vocab tile of W_out^T
                       bout_ref,     # (1, TN)   f32  vocab tile of b_out
                       logits_ref):  # (Tp, TN)  f32  logits tile
    h_b = hall_ref[...].astype(jnp.bfloat16)
    logits_ref[...] = (jnp.dot(h_b, wout_ref[...],
                               preferred_element_type=jnp.float32)
                       + bout_ref[...])


@jax.jit
def decoder_rnn_forward(token_ids, hidden, params):
    """Run DecoderRNN.forward for each token in `token_ids`, threading the hidden state.

    token_ids: int32 (T,)   -- T=1 is exactly one PyTorch forward() call.
    hidden:    (h, c) each (1, 1, H) (PyTorch LSTM hidden layout)
    Returns (logits (T, V), (h_new (1,1,H), c_new (1,1,H))).
    """
    emb = params["embedding"]                 # (V, H)
    V, H = emb.shape
    T = int(token_ids.shape[0])

    Hp = _round_up(H, 128)
    Vp = _round_up(V, 128)
    Tp = _round_up(max(T, 8), 8)
    TN = _choose_vocab_tile(Vp, Hp)
    NV = Vp // TN
    dh, dv = Hp - H, Vp - V
    WDT = jnp.bfloat16                        # weight storage dtype

    # --- weight preprocessing: lane-aligned padding + bf16 cast ------------------------
    emb_p = jnp.pad(emb, ((0, 0), (0, dh))).astype(WDT)                       # (V, Hp)

    def _pad_gate_t(w):      # (4H, H) -> (Hp, 4Hp): transpose + per-gate lane padding
        wt = w.T.reshape(H, 4, H)
        wt = jnp.pad(wt, ((0, dh), (0, 0), (0, dh)))
        return wt.reshape(Hp, 4 * Hp)

    w_ih_t = _pad_gate_t(params["w_ih"]).astype(WDT)                          # (Hp, 4Hp)
    w_hh_t = _pad_gate_t(params["w_hh"]).astype(WDT)                          # (Hp, 4Hp)

    bg = (params["b_ih"] + params["b_hh"]).reshape(4, H)
    bg = jnp.pad(bg, ((0, 0), (0, dh))).reshape(1, 4 * Hp).astype(jnp.float32)

    w_out = jnp.pad(params["w_out"].T, ((0, dh), (0, dv))).astype(WDT)        # (Hp, Vp)
    b_out = jnp.pad(params["b_out"], (0, dv)).reshape(1, Vp).astype(jnp.float32)

    h0 = jnp.pad(hidden[0].reshape(1, H), ((0, 0), (0, dh))).astype(jnp.float32)
    c0 = jnp.pad(hidden[1].reshape(1, H), ((0, 0), (0, dh))).astype(jnp.float32)

    # Embedding gather (data-dependent) done in the wrapper; padded rows are zero.
    ids = token_ids.astype(jnp.int32)
    x_rows = jnp.take(emb_p, ids, axis=0)                                     # (T, Hp) bf16
    x_rows = jnp.pad(x_rows, ((0, Tp - T), (0, 0)))                           # (Tp, Hp)

    # ---------------------------- Kernel A: recurrence ---------------------------------
    vmem_a = (2 * (Tp * Hp * 2)                 # x rows
              + 2 * 2 * (Hp * 4 * Hp * 2)       # w_ih^T, w_hh^T
              + 2 * (4 * Hp * 4)                # gate bias
              + 2 * 2 * (Hp * 4)                # h0, c0
              + 2 * (Tp * Hp * 4)               # hall out
              + 2 * 2 * (Hp * 4)                # hT, cT out
              + Tp * 4 * Hp * 4                 # xg scratch
              + (2 << 20))                      # compiler slack
    cost_a = pl.CostEstimate(
        flops=2 * Tp * Hp * 4 * Hp + T * 2 * Hp * 4 * Hp + 10 * T * Hp,
        transcendentals=T * 5 * Hp,
        bytes_accessed=(Tp * Hp * 2 + 2 * Hp * 4 * Hp * 2 + 4 * Hp * 4
                        + 4 * Hp * 4 + Tp * Hp * 4 + 4 * Hp * 4))

    hall, h_new, c_new = pl.pallas_call(
        _make_recurrence_kernel(T),
        out_shape=(
            jax.ShapeDtypeStruct((Tp, Hp), jnp.float32),
            jax.ShapeDtypeStruct((1, Hp), jnp.float32),
            jax.ShapeDtypeStruct((1, Hp), jnp.float32),
        ),
        grid=(1,),
        in_specs=[
            pl.BlockSpec((Tp, Hp), lambda i: (0, 0)),
            pl.BlockSpec((Hp, 4 * Hp), lambda i: (0, 0)),
            pl.BlockSpec((Hp, 4 * Hp), lambda i: (0, 0)),
            pl.BlockSpec((1, 4 * Hp), lambda i: (0, 0)),
            pl.BlockSpec((1, Hp), lambda i: (0, 0)),
            pl.BlockSpec((1, Hp), lambda i: (0, 0)),
        ],
        out_specs=(
            pl.BlockSpec((Tp, Hp), lambda i: (0, 0)),
            pl.BlockSpec((1, Hp), lambda i: (0, 0)),
            pl.BlockSpec((1, Hp), lambda i: (0, 0)),
        ),
        scratch_shapes=[pltpu.VMEM((Tp, 4 * Hp), jnp.float32)],
        compiler_params=pltpu.CompilerParams(
            dimension_semantics=("arbitrary",),
            vmem_limit_bytes=_vmem_limit(vmem_a)),
        cost_estimate=cost_a,
    )(x_rows, w_ih_t, w_hh_t, bg, h0, c0)

    # ------------------------ Kernel B: batched projection -----------------------------
    vmem_b = (2 * (Tp * Hp * 4)                 # hall
              + 2 * (Hp * TN * 2 + TN * 4)      # w_out + b_out tiles (double-buffered)
              + 2 * (Tp * TN * 4)               # logits tiles
              + (2 << 20))
    cost_b = pl.CostEstimate(
        flops=2 * Tp * Hp * Vp,
        transcendentals=0,
        bytes_accessed=Hp * Vp * 2 + Vp * 4 + Tp * Hp * 4 + Tp * Vp * 4)

    logits_p = pl.pallas_call(
        _projection_kernel,
        out_shape=jax.ShapeDtypeStruct((Tp, Vp), jnp.float32),
        grid=(NV,),
        in_specs=[
            pl.BlockSpec((Tp, Hp), lambda v: (0, 0)),
            pl.BlockSpec((Hp, TN), lambda v: (0, v)),
            pl.BlockSpec((1, TN), lambda v: (0, v)),
        ],
        out_specs=pl.BlockSpec((Tp, TN), lambda v: (0, v)),
        compiler_params=pltpu.CompilerParams(
            dimension_semantics=("parallel",),     # vocab tiles are independent (v7x 2 TCs)
            vmem_limit_bytes=_vmem_limit(vmem_b)),
        cost_estimate=cost_b,
    )(hall, w_out, b_out)

    logits = logits_p[:T, :V]
    h_out = h_new[:, :H].reshape(1, 1, H)
    c_out = c_new[:, :H].reshape(1, 1, H)
    return logits, (h_out, c_out)


def init_params(key, hidden_size, output_size):
    """Deterministic parameter init mirroring the PyTorch module's shapes."""
    H, V = hidden_size, output_size
    k = jax.random.split(key, 7)
    bound = 1.0 / jnp.sqrt(H)
    return {
        # nn.Embedding(output_size, hidden_size): N(0, 1)
        "embedding": jax.random.normal(k[0], (V, H), jnp.float32),
        # nn.LSTM(H, H): weight_ih_l0 (4H, H), weight_hh_l0 (4H, H), biases (4H,)
        "w_ih": jax.random.uniform(k[1], (4 * H, H), jnp.float32, -bound, bound),
        "w_hh": jax.random.uniform(k[2], (4 * H, H), jnp.float32, -bound, bound),
        "b_ih": jax.random.uniform(k[3], (4 * H,), jnp.float32, -bound, bound),
        "b_hh": jax.random.uniform(k[4], (4 * H,), jnp.float32, -bound, bound),
        # nn.Linear(H, V): weight (V, H), bias (V,)
        "w_out": jax.random.uniform(k[5], (V, H), jnp.float32, -bound, bound),
        "b_out": jax.random.uniform(k[6], (V,), jnp.float32, -bound, bound),
    }


def _reference_forward_seq(token_ids, hidden, params, quantize=True):
    """Pure-JAX reference of T sequential DecoderRNN.forward calls.

    quantize=True mirrors the kernel's bf16 weight storage / matmul-input rounding;
    quantize=False is the exact f32 PyTorch math.
    """
    H = params["embedding"].shape[1]

    def q(w):
        return w.astype(jnp.bfloat16).astype(jnp.float32) if quantize else w

    emb = q(params["embedding"])
    w_cat = jnp.concatenate([q(params["w_ih"]).T, q(params["w_hh"]).T], axis=0)  # (2H,4H)
    w_out = q(params["w_out"])
    b_gates = params["b_ih"] + params["b_hh"]

    h = hidden[0].reshape(1, H)
    c = hidden[1].reshape(1, H)
    logits_all = []
    for t in range(token_ids.shape[0]):
        x = jnp.maximum(emb[token_ids[t]].reshape(1, H), 0.0)
        xh = jnp.concatenate([x, h], axis=-1)
        if quantize:
            xh = xh.astype(jnp.bfloat16).astype(jnp.float32)
        gates = xh @ w_cat + b_gates
        i_g = jax.nn.sigmoid(gates[:, 0 * H:1 * H])
        f_g = jax.nn.sigmoid(gates[:, 1 * H:2 * H])
        g_g = jnp.tanh(gates[:, 2 * H:3 * H])
        o_g = jax.nn.sigmoid(gates[:, 3 * H:4 * H])
        c = f_g * c + i_g * g_g
        h = o_g * jnp.tanh(c)
        h_mm = h.astype(jnp.bfloat16).astype(jnp.float32) if quantize else h
        logits_all.append(h_mm @ w_out.T + params["b_out"])
    return jnp.concatenate(logits_all, axis=0), (h.reshape(1, 1, H), c.reshape(1, 1, H))


if __name__ == "__main__":
    hidden_size = 32
    output_size = 64

    key = jax.random.PRNGKey(0)
    pkey, hkey, ckey, ikey = jax.random.split(key, 4)
    params = init_params(pkey, hidden_size, output_size)

    h0 = jax.random.normal(hkey, (1, 1, hidden_size), jnp.float32)
    c0 = jax.random.normal(ckey, (1, 1, hidden_size), jnp.float32)

    # --- single step: exactly one DecoderRNN.forward call ------------------------------
    token_id = jnp.array([7], dtype=jnp.int32)
    logits1, (h1, c1) = decoder_rnn_forward(token_id, (h0, c0), params)
    jax.block_until_ready((logits1, h1, c1))
    ref1, (rh1, rc1) = _reference_forward_seq(token_id, (h0, c0), params, quantize=True)
    assert logits1.shape == (1, output_size)
    assert h1.shape == (1, 1, hidden_size) and c1.shape == (1, 1, hidden_size)
    assert jnp.allclose(logits1, ref1, atol=5e-3, rtol=5e-3)
    assert jnp.allclose(h1, rh1, atol=5e-3, rtol=5e-3)
    assert jnp.allclose(c1, rc1, atol=5e-3, rtol=5e-3)

    # --- multi-step decode: recurrence kernel + single-pass batched projection ---------
    T = 6
    ids = jax.random.randint(ikey, (T,), 0, output_size, dtype=jnp.int32)
    logits_seq, (hT, cT) = decoder_rnn_forward(ids, (h0, c0), params)
    jax.block_until_ready((logits_seq, hT, cT))
    ref_seq, (rhT, rcT) = _reference_forward_seq(ids, (h0, c0), params, quantize=True)
    assert logits_seq.shape == (T, output_size)
    assert jnp.allclose(logits_seq, ref_seq, atol=5e-3, rtol=5e-3)
    assert jnp.allclose(hT, rhT, atol=5e-3, rtol=5e-3)
    assert jnp.allclose(cT, rcT, atol=5e-3, rtol=5e-3)

    # loose sanity vs. the exact f32 PyTorch math (bf16 weight storage -> tiny deviation)
    f32_seq, _ = _reference_forward_seq(ids, (h0, c0), params, quantize=False)
    assert float(jnp.max(jnp.abs(logits_seq - f32_seq))) < 0.1

    print("KERNEL_OK")
</pallas_src>

<mosaic_0001>
module attributes {stable_mosaic.version = 11 : i64} {
  func.func @kernel(%arg0: i32, %arg1: memref<8x128xbf16, #tpu.memory_space<vmem>>, %arg2: memref<128x512xbf16, #tpu.memory_space<vmem>>, %arg3: memref<128x512xbf16, #tpu.memory_space<vmem>>, %arg4: memref<1x512xf32, #tpu.memory_space<vmem>>, %arg5: memref<1x128xf32, #tpu.memory_space<vmem>>, %arg6: memref<1x128xf32, #tpu.memory_space<vmem>>, %arg7: memref<8x128xf32, #tpu.memory_space<vmem>>, %arg8: memref<1x128xf32, #tpu.memory_space<vmem>>, %arg9: memref<1x128xf32, #tpu.memory_space<vmem>>, %arg10: memref<8x512xf32, #tpu.memory_space<vmem>>) attributes {dimension_semantics = [#tpu.dimension_semantics<arbitrary>], iteration_bounds = array<i64: 1>, scalar_prefetch = 0 : i64, scratch_operands = 1 : i64, tpu.core_type = #tpu.core_type<tc>, window_params = [{pipeline_mode = #tpu.pipeline_mode<synchronous>, transform_indices = @transform_0, window_bounds = array<i64: 8, 128>}, {pipeline_mode = #tpu.pipeline_mode<synchronous>, transform_indices = @transform_1, window_bounds = array<i64: 128, 512>}, {pipeline_mode = #tpu.pipeline_mode<synchronous>, transform_indices = @transform_2, window_bounds = array<i64: 128, 512>}, {pipeline_mode = #tpu.pipeline_mode<synchronous>, transform_indices = @transform_3, window_bounds = array<i64: 1, 512>}, {pipeline_mode = #tpu.pipeline_mode<synchronous>, transform_indices = @transform_4, window_bounds = array<i64: 1, 128>}, {pipeline_mode = #tpu.pipeline_mode<synchronous>, transform_indices = @transform_5, window_bounds = array<i64: 1, 128>}, {pipeline_mode = #tpu.pipeline_mode<synchronous>, transform_indices = @transform_6, window_bounds = array<i64: 8, 128>}, {pipeline_mode = #tpu.pipeline_mode<synchronous>, transform_indices = @transform_7, window_bounds = array<i64: 1, 128>}, {pipeline_mode = #tpu.pipeline_mode<synchronous>, transform_indices = @transform_8, window_bounds = array<i64: 1, 128>}]} {
    %c0 = arith.constant 0 : index
    %c0_0 = arith.constant 0 : index
    %0 = vector.load %arg1[%c0, %c0_0] : memref<8x128xbf16, #tpu.memory_space<vmem>>, vector<8x128xbf16>
    %cst = arith.constant 0.000000e+00 : bf16
    %1 = vector.broadcast %cst : bf16 to vector<8x128xbf16>
    %2 = arith.maximumf %0, %1 : vector<8x128xbf16>
    %c0_1 = arith.constant 0 : index
    %c0_2 = arith.constant 0 : index
    %3 = vector.load %arg2[%c0_1, %c0_2] : memref<128x512xbf16, #tpu.memory_space<vmem>>, vector<128x512xbf16>
    %cst_3 = arith.constant dense<0.000000e+00> : vector<8x512xf32>
    %4 = tpu.matmul %2, %3, %cst_3 {dimension_numbers = #tpu.dot_dimension_numbers<[1], [0], [0], [1], [0, 0, 1, 1], [], []>} : vector<8x128xbf16>, vector<128x512xbf16>, vector<8x512xf32> -> vector<8x512xf32>
    %c0_4 = arith.constant 0 : index
    %c0_5 = arith.constant 0 : index
    %5 = vector.load %arg4[%c0_4, %c0_5] : memref<1x512xf32, #tpu.memory_space<vmem>>, vector<1x512xf32>
    %6 = vector.broadcast %5 : vector<1x512xf32> to vector<8x512xf32>
    %7 = arith.addf %4, %6 : vector<8x512xf32>
    %c0_6 = arith.constant 0 : index
    %c0_7 = arith.constant 0 : index
    %8 = vector.load %arg10[%c0_6, %c0_7] : memref<8x512xf32, #tpu.memory_space<vmem>>, vector<8x512xf32>
    tpu.vector_store %arg10[%c0_6, %c0_7], %7 {strides = array<i32>} : memref<8x512xf32, #tpu.memory_space<vmem>>, vector<8x512xf32>,
    %cst_8 = arith.constant 0.000000e+00 : f32
    %9 = vector.broadcast %cst_8 : f32 to vector<8x128xf32>
    %c0_9 = arith.constant 0 : index
    %c0_10 = arith.constant 0 : index
    %10 = vector.load %arg7[%c0_9, %c0_10] : memref<8x128xf32, #tpu.memory_space<vmem>>, vector<8x128xf32>
    tpu.vector_store %arg7[%c0_9, %c0_10], %9 {strides = array<i32>} : memref<8x128xf32, #tpu.memory_space<vmem>>, vector<8x128xf32>,
    %c0_11 = arith.constant 0 : index
    %c0_12 = arith.constant 0 : index
    %11 = vector.load %arg3[%c0_11, %c0_12] : memref<128x512xbf16, #tpu.memory_space<vmem>>, vector<128x512xbf16>
    %c0_13 = arith.constant 0 : index
    %c0_14 = arith.constant 0 : index
    %12 = vector.load %arg5[%c0_13, %c0_14] : memref<1x128xf32, #tpu.memory_space<vmem>>, vector<1x128xf32>
    %c0_15 = arith.constant 0 : index
    %c0_16 = arith.constant 0 : index
    %13 = vector.load %arg6[%c0_15, %c0_16] : memref<1x128xf32, #tpu.memory_space<vmem>>, vector<1x128xf32>
    %c0_i32 = arith.constant 0 : i32
    %14 = arith.index_cast %c0_i32 : i32 to index
    %c0_17 = arith.constant 0 : index
    %15 = vector.load %arg10[%14, %c0_17] : memref<8x512xf32, #tpu.memory_space<vmem>>, vector<1x512xf32>
    %16 = arith.truncf %12 : vector<1x128xf32> to vector<1x128xbf16>
    %cst_18 = arith.constant dense<0.000000e+00> : vector<1x512xf32>
    %17 = tpu.matmul %16, %11, %cst_18 {dimension_numbers = #tpu.dot_dimension_numbers<[1], [0], [0], [1], [0, 0, 1, 1], [], []>} : vector<1x128xbf16>, vector<128x512xbf16>, vector<1x512xf32> -> vector<1x512xf32>
    %18 = arith.addf %15, %17 : vector<1x512xf32>
    %19 = vector.extract_strided_slice %18 {offsets = [0, 0], sizes = [1, 128], strides = [1, 1]} : vector<1x512xf32> to vector<1x128xf32>
    %20 = arith.negf %19 : vector<1x128xf32>
    %21 = math.exp %20 : vector<1x128xf32>
    %cst_19 = arith.constant 1.000000e+00 : f32
    %22 = vector.broadcast %cst_19 : f32 to vector<1x128xf32>
    %23 = arith.addf %22, %21 : vector<1x128xf32>
    %24 = arith.divf %22, %23 : vector<1x128xf32>
    %25 = vector.extract_strided_slice %18 {offsets = [0, 128], sizes = [1, 128], strides = [1, 1]} : vector<1x512xf32> to vector<1x128xf32>
    %26 = arith.negf %25 : vector<1x128xf32>
    %27 = math.exp %26 : vector<1x128xf32>
    %cst_20 = arith.constant 1.000000e+00 : f32
    %28 = vector.broadcast %cst_20 : f32 to vector<1x128xf32>
    %29 = arith.addf %28, %27 : vector<1x128xf32>
    %30 = arith.divf %28, %29 : vector<1x128xf32>
    %31 = vector.extract_strided_slice %18 {offsets = [0, 256], sizes = [1, 128], strides = [1, 1]} : vector<1x512xf32> to vector<1x128xf32>
    %32 = math.tanh %31 : vector<1x128xf32>
    %33 = vector.extract_strided_slice %18 {offsets = [0, 384], sizes = [1, 128], strides = [1, 1]} : vector<1x512xf32> to vector<1x128xf32>
    %34 = arith.negf %33 : vector<1x128xf32>
    %35 = math.exp %34 : vector<1x128xf32>
    %cst_21 = arith.constant 1.000000e+00 : f32
    %36 = vector.broadcast %cst_21 : f32 to vector<1x128xf32>
    %37 = arith.addf %36, %35 : vector<1x128xf32>
    %38 = arith.divf %36, %37 : vector<1x128xf32>
    %39 = arith.mulf %30, %13 : vector<1x128xf32>
    %40 = arith.mulf %24, %32 : vector<1x128xf32>
    %41 = arith.addf %39, %40 : vector<1x128xf32>
    %42 = math.tanh %41 : vector<1x128xf32>
    %43 = arith.mulf %38, %42 : vector<1x128xf32>
    %44 = arith.index_cast %c0_i32 : i32 to index
    %c0_22 = arith.constant 0 : index
    %45 = vector.load %arg7[%44, %c0_22] : memref<8x128xf32, #tpu.memory_space<vmem>>, vector<1x128xf32>
    tpu.vector_store %arg7[%44, %c0_22], %43 {strides = array<i32>} : memref<8x128xf32, #tpu.memory_space<vmem>>, vector<1x128xf32>,
    %c1_i32 = arith.constant 1 : i32
    %c0_23 = arith.constant 0 : index
    %c0_24 = arith.constant 0 : index
    %46 = vector.load %arg8[%c0_23, %c0_24] : memref<1x128xf32, #tpu.memory_space<vmem>>, vector<1x128xf32>
    tpu.vector_store %arg8[%c0_23, %c0_24], %43 {strides = array<i32>} : memref<1x128xf32, #tpu.memory_space<vmem>>, vector<1x128xf32>,
    %c0_25 = arith.constant 0 : index
    %c0_26 = arith.constant 0 : index
    %47 = vector.load %arg9[%c0_25, %c0_26] : memref<1x128xf32, #tpu.memory_space<vmem>>, vector<1x128xf32>
    tpu.vector_store %arg9[%c0_25, %c0_26], %41 {strides = array<i32>} : memref<1x128xf32, #tpu.memory_space<vmem>>, vector<1x128xf32>,
    return
  }
  func.func @transform_0(%arg0: i32) -> (i32, i32) {
    %c0_i32 = arith.constant 0 : i32
    %c0_i32_0 = arith.constant 0 : i32
    %c0_i32_1 = arith.constant 0 : i32
    return %c0_i32, %c0_i32_0 : i32, i32
  }
  func.func @transform_1(%arg0: i32) -> (i32, i32) {
    %c0_i32 = arith.constant 0 : i32
    %c0_i32_0 = arith.constant 0 : i32
    %c0_i32_1 = arith.constant 0 : i32
    return %c0_i32, %c0_i32_0 : i32, i32
  }
  func.func @transform_2(%arg0: i32) -> (i32, i32) {
    %c0_i32 = arith.constant 0 : i32
    %c0_i32_0 = arith.constant 0 : i32
    %c0_i32_1 = arith.constant 0 : i32
    return %c0_i32, %c0_i32_0 : i32, i32
  }
  func.func @transform_3(%arg0: i32) -> (i32, i32) {
    %c0_i32 = arith.constant 0 : i32
    %c0_i32_0 = arith.constant 0 : i32
    %c0_i32_1 = arith.constant 0 : i32
    return %c0_i32, %c0_i32_0 : i32, i32
  }
  func.func @transform_4(%arg0: i32) -> (i32, i32) {
    %c0_i32 = arith.constant 0 : i32
    %c0_i32_0 = arith.constant 0 : i32
    %c0_i32_1 = arith.constant 0 : i32
    return %c0_i32, %c0_i32_0 : i32, i32
  }
  func.func @transform_5(%arg0: i32) -> (i32, i32) {
    %c0_i32 = arith.constant 0 : i32
    %c0_i32_0 = arith.constant 0 : i32
    %c0_i32_1 = arith.constant 0 : i32
    return %c0_i32, %c0_i32_0 : i32, i32
  }
  func.func @transform_6(%arg0: i32) -> (i32, i32) {
    %c0_i32 = arith.constant 0 : i32
    %c0_i32_0 = arith.constant 0 : i32
    %c0_i32_1 = arith.constant 0 : i32
    return %c0_i32, %c0_i32_0 : i32, i32
  }
  func.func @transform_7(%arg0: i32) -> (i32, i32) {
    %c0_i32 = arith.constant 0 : i32
    %c0_i32_0 = arith.constant 0 : i32
    %c0_i32_1 = arith.constant 0 : i32
    return %c0_i32, %c0_i32_0 : i32, i32
  }
  func.func @transform_8(%arg0: i32) -> (i32, i32) {
    %c0_i32 = arith.constant 0 : i32
    %c0_i32_0 = arith.constant 0 : i32
    %c0_i32_1 = arith.constant 0 : i32
    return %c0_i32, %c0_i32_0 : i32, i32
  }
}

module attributes {stable_mosaic.version = 11 : i64} {
  func.func @_projection_kernel(%arg0: i32, %arg1: memref<8x128xf32, #tpu.memory_space<vmem>>, %arg2: memref<128x128xbf16, #tpu.memory_space<vmem>>, %arg3: memref<1x128xf32, #tpu.memory_space<vmem>>, %arg4: memref<8x128xf32, #tpu.memory_space<vmem>>) attributes {dimension_semantics = [#tpu.dimension_semantics<parallel>], iteration_bounds = array<i64: 1>, scalar_prefetch = 0 : i64, scratch_operands = 0 : i64, tpu.core_type = #tpu.core_type<tc>, window_params = [{pipeline_mode = #tpu.pipeline_mode<synchronous>, transform_indices = @transform_0, window_bounds = array<i64: 8, 128>}, {transform_indices = @transform_1, window_bounds = array<i64: 128, 128>}, {transform_indices = @transform_2, window_bounds = array<i64: 1, 128>}, {transform_indices = @transform_3, window_bounds = array<i64: 8, 128>}]} {
    %c0 = arith.constant 0 : index
    %c0_0 = arith.constant 0 : index
    %0 = vector.load %arg1[%c0, %c0_0] : memref<8x128xf32, #tpu.memory_space<vmem>>, vector<8x128xf32>
    %1 = arith.truncf %0 : vector<8x128xf32> to vector<8x128xbf16>
    %c0_1 = arith.constant 0 : index
    %c0_2 = arith.constant 0 : index
    %2 = vector.load %arg2[%c0_1, %c0_2] : memref<128x128xbf16, #tpu.memory_space<vmem>>, vector<128x128xbf16>
    %cst = arith.constant dense<0.000000e+00> : vector<8x128xf32>
    %3 = tpu.matmul %1, %2, %cst {dimension_numbers = #tpu.dot_dimension_numbers<[1], [0], [0], [1], [0, 0, 1, 1], [], []>} : vector<8x128xbf16>, vector<128x128xbf16>, vector<8x128xf32> -> vector<8x128xf32>
    %c0_3 = arith.constant 0 : index
    %c0_4 = arith.constant 0 : index
    %4 = vector.load %arg3[%c0_3, %c0_4] : memref<1x128xf32, #tpu.memory_space<vmem>>, vector<1x128xf32>
    %5 = vector.broadcast %4 : vector<1x128xf32> to vector<8x128xf32>
    %6 = arith.addf %3, %5 : vector<8x128xf32>
    %c0_5 = arith.constant 0 : index
    %c0_6 = arith.constant 0 : index
    %7 = vector.load %arg4[%c0_5, %c0_6] : memref<8x128xf32, #tpu.memory_space<vmem>>, vector<8x128xf32>
    tpu.vector_store %arg4[%c0_5, %c0_6], %6 {strides = array<i32>} : memref<8x128xf32, #tpu.memory_space<vmem>>, vector<8x128xf32>,
    return
  }
  func.func @transform_0(%arg0: i32) -> (i32, i32) {
    %c0_i32 = arith.constant 0 : i32
    %c0_i32_0 = arith.constant 0 : i32
    %c0_i32_1 = arith.constant 0 : i32
    return %c0_i32, %c0_i32_0 : i32, i32
  }
  func.func @transform_1(%arg0: i32) -> (i32, i32) {
    %c0_i32 = arith.constant 0 : i32
    %c0_i32_0 = arith.constant 0 : i32
    return %c0_i32, %arg0 : i32, i32
  }
  func.func @transform_2(%arg0: i32) -> (i32, i32) {
    %c0_i32 = arith.constant 0 : i32
    %c0_i32_0 = arith.constant 0 : i32
    return %c0_i32, %arg0 : i32, i32
  }
  func.func @transform_3(%arg0: i32) -> (i32, i32) {
    %c0_i32 = arith.constant 0 : i32
    %c0_i32_0 = arith.constant 0 : i32
    return %c0_i32, %arg0 : i32, i32
  }
}

</mosaic_0001>

<llo_original>
// kernel: decoder_rnn_forward.3
$region0: #{decoder_rnn_forward.3}
  #allocation0 [shape = 'u32[]', space=smem, size = 0x4, offset = 0x4, fixed_abs, tag = 'smem constant byte address 0x4 - core index']
  #allocation1 [shape = 'u32[72,128]{1,0:T(1,128)}', space=vmem, size = 0x9000, scoped, tag = 'internal scratch']
  %s0 = inlined_call_operand.vmem [shape: f32[8,128], index: 0, kind: input, shape index: {}]
  %s1 = inlined_call_operand.vmem [shape: bf16[128,128], index: 1, kind: input, shape index: {}]
  %s2 = inlined_call_operand.vmem [shape: f32[1,128], index: 2, kind: input, shape index: {}]
  %s3 = inlined_call_operand.vmem [shape: f32[8,128], index: 3, kind: output, shape index: {}]
  %s4 = sld [smem:[#allocation0]]
  $region22: #{decoder_rnn_forward.3} parent=0
    _
  %s6 = ssub.s32 1, %s4
  %s7 = scalar_select 0, %s6, %s4
  // Predicated region
  $region2: #{decoder_rnn_forward.3} parent=0 // pred_check
    _
  $region3: #{decoder_rnn_forward.3} parent=0 // pred_check_branch
    %9 = sbr.rel (0) target = $region5
  $region4: #{decoder_rnn_forward.3} parent=0 // pred_region
    _
  $region5: #{decoder_rnn_forward.3} parent=0 // pred_fallthru
    _
  // Predicated region
  $region6: #{decoder_rnn_forward.3} parent=0 // pred_check
    _
  $region7: #{decoder_rnn_forward.3} parent=0 // pred_check_branch
    %11 = sbr.rel (0) target = $region9
  $region8: #{decoder_rnn_forward.3} parent=0 // pred_region
    _
  $region9: #{decoder_rnn_forward.3} parent=0 // pred_fallthru
    _
  // Predicated region
  $region10: #{decoder_rnn_forward.3} parent=0 // pred_check
    _
  $region11: #{decoder_rnn_forward.3} parent=0 // pred_check_branch
    %13 = sbr.rel (0) target = $region13
  $region12: #{decoder_rnn_forward.3} parent=0 // pred_region
    _
  $region13: #{decoder_rnn_forward.3} parent=0 // pred_fallthru
    _
  %v14 = vld [vmem:[%s0] sm:$0xff]
  %v15 = vpack.c.bf16 %v14, %v14
  %v16 = vld [vmem:[%s1] sm:$0xf]
  %v17 = vld [vmem:[%s1 + $0x4] sm:$0xf]
  %v18 = vld [vmem:[%s1 + $0x8] sm:$0xf]
  %v19 = vld [vmem:[%s1 + $0xc] sm:$0xf]
  %v20 = vld [vmem:[%s1 + $0x10] sm:$0xf]
  %v21 = vld [vmem:[%s1 + $0x14] sm:$0xf]
  %v22 = vld [vmem:[%s1 + $0x18] sm:$0xf]
  %v23 = vld [vmem:[%s1 + $0x1c] sm:$0xf]
  %v24 = vld [vmem:[%s1 + $0x20] sm:$0xf]
  %v25 = vld [vmem:[%s1 + $0x24] sm:$0xf]
  %v26 = vld [vmem:[%s1 + $0x28] sm:$0xf]
  %v27 = vld [vmem:[%s1 + $0x2c] sm:$0xf]
  %v28 = vld [vmem:[%s1 + $0x30] sm:$0xf]
  %v29 = vld [vmem:[%s1 + $0x34] sm:$0xf]
  %v30 = vld [vmem:[%s1 + $0x38] sm:$0xf]
  %v31 = vld [vmem:[%s1 + $0x3c] sm:$0xf]
  %v32 = vld [vmem:[%s2] sm:$0x1]
  %v34 = vperm.slane %v32, 0
  %v52 = vunpack.c.l.b16 %v16
  %v53 = vunpack.c.l.b16 %v17
  %v54 = vunpack.c.l.b16 %v18
  %v55 = vunpack.c.l.b16 %v19
  %v56 = vunpack.c.l.b16 %v20
  %v57 = vunpack.c.l.b16 %v21
  %v58 = vunpack.c.l.b16 %v22
  %v59 = vunpack.c.l.b16 %v23
  %v60 = vunpack.c.l.b16 %v24
  %v61 = vunpack.c.l.b16 %v25
  %v62 = vunpack.c.l.b16 %v26
  %v63 = vunpack.c.l.b16 %v27
  %v64 = vunpack.c.l.b16 %v28
  %v65 = vunpack.c.l.b16 %v29
  %v66 = vunpack.c.l.b16 %v30
  %v67 = vunpack.c.l.b16 %v31
  %v68 = vpack.c.b16 %v53, %v52
  %v69 = vpack.c.b16 %v55, %v54
  %v70 = vpack.c.b16 %v57, %v56
  %v71 = vpack.c.b16 %v59, %v58
  %v72 = vpack.c.b16 %v61, %v60
  %v73 = vpack.c.b16 %v63, %v62
  %v74 = vpack.c.b16 %v65, %v64
  %v75 = vpack.c.b16 %v67, %v66
  %84 = vmatpush.bf16.msra.mxu0 %v75
  %85 = vmatpush.bf16.msra.mxu0 %v74
  %86 = vmatpush.bf16.msra.mxu0 %v73
  %87 = vmatpush.bf16.msra.mxu0 %v72
  %88 = vmatpush.bf16.msra.mxu0 %v71
  %89 = vmatpush.bf16.msra.mxu0 %v70
  %90 = vmatpush.bf16.msra.mxu0 %v69
  %91 = vmatpush.bf16.msra.mxu0 %v68
  %92 = vmatmul.bf16.gmra.mxu0 %v15
  %v93 = vpop.f32.mrf.mxu0
  %v94 = vadd.f32 %v34, %v93
  %v95 = vpop.f32.mrf.mxu0
  %96 = vdwg.mxu0
  %97 = vst [vmem:[%s3] sm:$0xff] %v94
  // Predicated region
  $region14: #{decoder_rnn_forward.3} parent=0 // pred_check
    _
  $region15: #{decoder_rnn_forward.3} parent=0 // pred_check_branch
    %99 = sbr.rel (0) target = $region17
  $region16: #{decoder_rnn_forward.3} parent=0 // pred_region
    _
  $region17: #{decoder_rnn_forward.3} parent=0 // pred_fallthru
    _
  // Predicated region
  $region18: #{decoder_rnn_forward.3} parent=0 // pred_check
    _
  $region19: #{decoder_rnn_forward.3} parent=0 // pred_check_branch
    %101 = sbr.rel (0) target = $region21
  $region20: #{decoder_rnn_forward.3} parent=0 // pred_region
    _
  $region21: #{decoder_rnn_forward.3} parent=0 // pred_fallthru
    _

// kernel: decoder_rnn_forward.2
$region0: #{decoder_rnn_forward.2}
  #allocation0 [shape = 'u32[]', space=smem, size = 0x4, offset = 0x4, fixed_abs, tag = 'smem constant byte address 0x4 - core index']
  #allocation1 [shape = 'u32[72,128]{1,0:T(1,128)}', space=vmem, size = 0x9000, scoped, tag = 'internal scratch']
  #allocation2 [shape = 'f32[8,512]{1,0:T(8,128)}', space=vmem, size = 0x4000, scoped, tag = 'scratch operand']
  %s0 = inlined_call_operand.vmem [shape: bf16[8,128], index: 0, kind: input, shape index: {}]
  %s1 = inlined_call_operand.vmem [shape: bf16[128,512], index: 1, kind: input, shape index: {}]
  %s2 = inlined_call_operand.vmem [shape: bf16[128,512], index: 2, kind: input, shape index: {}]
  %s3 = inlined_call_operand.vmem [shape: f32[1,512], index: 3, kind: input, shape index: {}]
  %s4 = inlined_call_operand.vmem [shape: f32[1,128], index: 4, kind: input, shape index: {}]
  %s5 = inlined_call_operand.vmem [shape: f32[1,128], index: 5, kind: input, shape index: {}]
  %s6 = inlined_call_operand.vmem [shape: f32[8,128], index: 6, kind: output, shape index: {0}]
  %s7 = inlined_call_operand.vmem [shape: f32[1,128], index: 7, kind: output, shape index: {1}]
  %s8 = inlined_call_operand.vmem [shape: f32[1,128], index: 8, kind: output, shape index: {2}]
  %9 = xla_tuple %s6, %s7, %s8
  %s10 = sld [smem:[#allocation0]]
  $region50: #{decoder_rnn_forward.2} parent=0
    _
  %s12 = ssub.s32 1, %s10
  %s13 = scalar_select 0, %s12, %s10
  // Predicated region
  $region2: #{decoder_rnn_forward.2} parent=0 // pred_check
    _
  $region3: #{decoder_rnn_forward.2} parent=0 // pred_check_branch
    %15 = sbr.rel (0) target = $region5
  $region4: #{decoder_rnn_forward.2} parent=0 // pred_region
    _
  $region5: #{decoder_rnn_forward.2} parent=0 // pred_fallthru
    _
  // Predicated region
  $region6: #{decoder_rnn_forward.2} parent=0 // pred_check
    _
  $region7: #{decoder_rnn_forward.2} parent=0 // pred_check_branch
    %17 = sbr.rel (0) target = $region9
  $region8: #{decoder_rnn_forward.2} parent=0 // pred_region
    _
  $region9: #{decoder_rnn_forward.2} parent=0 // pred_fallthru
    _
  // Predicated region
  $region10: #{decoder_rnn_forward.2} parent=0 // pred_check
    _
  $region11: #{decoder_rnn_forward.2} parent=0 // pred_check_branch
    %19 = sbr.rel (0) target = $region13
  $region12: #{decoder_rnn_forward.2} parent=0 // pred_region
    _
  $region13: #{decoder_rnn_forward.2} parent=0 // pred_fallthru
    _
  // Predicated region
  $region14: #{decoder_rnn_forward.2} parent=0 // pred_check
    _
  $region15: #{decoder_rnn_forward.2} parent=0 // pred_check_branch
    %21 = sbr.rel (0) target = $region17
  $region16: #{decoder_rnn_forward.2} parent=0 // pred_region
    _
  $region17: #{decoder_rnn_forward.2} parent=0 // pred_fallthru
    _
  // Predicated region
  $region18: #{decoder_rnn_forward.2} parent=0 // pred_check
    _
  $region19: #{decoder_rnn_forward.2} parent=0 // pred_check_branch
    %23 = sbr.rel (0) target = $region21
  $region20: #{decoder_rnn_forward.2} parent=0 // pred_region
    _
  $region21: #{decoder_rnn_forward.2} parent=0 // pred_fallthru
    _
  // Predicated region
  $region22: #{decoder_rnn_forward.2} parent=0 // pred_check
    _
  $region23: #{decoder_rnn_forward.2} parent=0 // pred_check_branch
    %25 = sbr.rel (0) target = $region25
  $region24: #{decoder_rnn_forward.2} parent=0 // pred_region
    _
  $region25: #{decoder_rnn_forward.2} parent=0 // pred_fallthru
    _
  %v26 = vld [vmem:[%s0] sm:$0xf]
  %v27 = vunpack.c.l.bf16 %v26
  %v28 = vmax.f32 %v27, 0.0
  %v29 = vpack.c.bf16 %v28, %v28
  %v30 = vld [vmem:[%s1] sm:$0xff]
  %v31 = vld [vmem:[%s1 + $0x8] sm:$0xff]
  %v32 = vld [vmem:[%s1 + $0x10] sm:$0xff]
  %v33 = vld [vmem:[%s1 + $0x18] sm:$0xff]
  %v34 = vld [vmem:[%s1 + $0x20] sm:$0xff]
  %v35 = vld [vmem:[%s1 + $0x28] sm:$0xff]
  %v36 = vld [vmem:[%s1 + $0x30] sm:$0xff]
  %v37 = vld [vmem:[%s1 + $0x38] sm:$0xff]
  %v38 = vld [vmem:[%s1 + $0x40] sm:$0xff]
  %v39 = vld [vmem:[%s1 + $0x48] sm:$0xff]
  %v40 = vld [vmem:[%s1 + $0x50] sm:$0xff]
  %v41 = vld [vmem:[%s1 + $0x58] sm:$0xff]
  %v42 = vld [vmem:[%s1 + $0x60] sm:$0xff]
  %v43 = vld [vmem:[%s1 + $0x68] sm:$0xff]
  %v44 = vld [vmem:[%s1 + $0x70] sm:$0xff]
  %v45 = vld [vmem:[%s1 + $0x78] sm:$0xff]
  %v46 = vld [vmem:[%s1 + $0x80] sm:$0xff]
  %v47 = vld [vmem:[%s1 + $0x88] sm:$0xff]
  %v48 = vld [vmem:[%s1 + $0x90] sm:$0xff]
  %v49 = vld [vmem:[%s1 + $0x98] sm:$0xff]
  %v50 = vld [vmem:[%s1 + $0xa0] sm:$0xff]
  %v51 = vld [vmem:[%s1 + $0xa8] sm:$0xff]
  %v52 = vld [vmem:[%s1 + $0xb0] sm:$0xff]
  %v53 = vld [vmem:[%s1 + $0xb8] sm:$0xff]
  %v54 = vld [vmem:[%s1 + $0xc0] sm:$0xff]
  %v55 = vld [vmem:[%s1 + $0xc8] sm:$0xff]
  %v56 = vld [vmem:[%s1 + $0xd0] sm:$0xff]
  %v57 = vld [vmem:[%s1 + $0xd8] sm:$0xff]
  %v58 = vld [vmem:[%s1 + $0xe0] sm:$0xff]
  %v59 = vld [vmem:[%s1 + $0xe8] sm:$0xff]
  %v60 = vld [vmem:[%s1 + $0xf0] sm:$0xff]
  %v61 = vld [vmem:[%s1 + $0xf8] sm:$0xff]
  %v62 = vld [vmem:[%s3] sm:$0xf]
  %v64 = vperm.slane %v62, 0
  %v65 = vperm.slane %v62, 1
  %v66 = vperm.slane %v62, 2
  %v67 = vperm.slane %v62, 3
  %v104 = vunpack.c.l.b16 %v30
  %v105 = vunpack.c.h.b16 %v30
  %v106 = vunpack.c.l.b16 %v31
  %v107 = vunpack.c.h.b16 %v31
  %v108 = vunpack.c.l.b16 %v32
  %v109 = vunpack.c.h.b16 %v32
  %v110 = vunpack.c.l.b16 %v33
  %v111 = vunpack.c.h.b16 %v33
  %v112 = vunpack.c.l.b16 %v34
  %v113 = vunpack.c.h.b16 %v34
  %v114 = vunpack.c.l.b16 %v35
  %v115 = vunpack.c.h.b16 %v35
  %v116 = vunpack.c.l.b16 %v36
  %v117 = vunpack.c.h.b16 %v36
  %v118 = vunpack.c.l.b16 %v37
  %v119 = vunpack.c.h.b16 %v37
  %v120 = vunpack.c.l.b16 %v38
  %v121 = vunpack.c.h.b16 %v38
  %v122 = vunpack.c.l.b16 %v39
  %v123 = vunpack.c.h.b16 %v39
  %v124 = vunpack.c.l.b16 %v40
  %v125 = vunpack.c.h.b16 %v40
  %v126 = vunpack.c.l.b16 %v41
  %v127 = vunpack.c.h.b16 %v41
  %v128 = vunpack.c.l.b16 %v42
  %v129 = vunpack.c.h.b16 %v42
  %v130 = vunpack.c.l.b16 %v43
  %v131 = vunpack.c.h.b16 %v43
  %v132 = vunpack.c.l.b16 %v44
  %v133 = vunpack.c.h.b16 %v44
  %v134 = vunpack.c.l.b16 %v45
  %v135 = vunpack.c.h.b16 %v45
  %v136 = vunpack.c.l.b16 %v46
  %v137 = vunpack.c.h.b16 %v46
  %v138 = vunpack.c.l.b16 %v47
  %v139 = vunpack.c.h.b16 %v47
  %v140 = vunpack.c.l.b16 %v48
  %v141 = vunpack.c.h.b16 %v48
  %v142 = vunpack.c.l.b16 %v49
  %v143 = vunpack.c.h.b16 %v49
  %v144 = vunpack.c.l.b16 %v50
  %v145 = vunpack.c.h.b16 %v50
  %v146 = vunpack.c.l.b16 %v51
  %v147 = vunpack.c.h.b16 %v51
  %v148 = vunpack.c.l.b16 %v52
  %v149 = vunpack.c.h.b16 %v52
  %v150 = vunpack.c.l.b16 %v53
  %v151 = vunpack.c.h.b16 %v53
  %v152 = vunpack.c.l.b16 %v54
  %v153 = vunpack.c.h.b16 %v54
  %v154 = vunpack.c.l.b16 %v55
  %v155 = vunpack.c.h.b16 %v55
  %v156 = vunpack.c.l.b16 %v56
  %v157 = vunpack.c.h.b16 %v56
  %v158 = vunpack.c.l.b16 %v57
  %v159 = vunpack.c.h.b16 %v57
  %v160 = vunpack.c.l.b16 %v58
  %v161 = vunpack.c.h.b16 %v58
  %v162 = vunpack.c.l.b16 %v59
  %v163 = vunpack.c.h.b16 %v59
  %v164 = vunpack.c.l.b16 %v60
  %v165 = vunpack.c.h.b16 %v60
  %v166 = vunpack.c.l.b16 %v61
  %v167 = vunpack.c.h.b16 %v61
  %v168 = vpack.c.b16 %v108, %v104
  %v169 = vpack.c.b16 %v109, %v105
  %v170 = vpack.c.b16 %v110, %v106
  %v171 = vpack.c.b16 %v111, %v107
  %v172 = vpack.c.b16 %v116, %v112
  %v173 = vpack.c.b16 %v117, %v113
  %v174 = vpack.c.b16 %v118, %v114
  %v175 = vpack.c.b16 %v119, %v115
  %v176 = vpack.c.b16 %v124, %v120
  %v177 = vpack.c.b16 %v125, %v121
  %v178 = vpack.c.b16 %v126, %v122
  %v179 = vpack.c.b16 %v127, %v123
  %v180 = vpack.c.b16 %v132, %v128
  %v181 = vpack.c.b16 %v133, %v129
  %v182 = vpack.c.b16 %v134, %v130
  %v183 = vpack.c.b16 %v135, %v131
  %v184 = vpack.c.b16 %v140, %v136
  %v185 = vpack.c.b16 %v141, %v137
  %v186 = vpack.c.b16 %v142, %v138
  %v187 = vpack.c.b16 %v143, %v139
  %v188 = vpack.c.b16 %v148, %v144
  %v189 = vpack.c.b16 %v149, %v145
  %v190 = vpack.c.b16 %v150, %v146
  %v191 = vpack.c.b16 %v151, %v147
  %v192 = vpack.c.b16 %v156, %v152
  %v193 = vpack.c.b16 %v157, %v153
  %v194 = vpack.c.b16 %v158, %v154
  %v195 = vpack.c.b16 %v159, %v155
  %v196 = vpack.c.b16 %v164, %v160
  %v197 = vpack.c.b16 %v165, %v161
  %v198 = vpack.c.b16 %v166, %v162
  %v199 = vpack.c.b16 %v167, %v163
  %232 = vmatpush.bf16.msra.mxu0 %v196
  %233 = vmatpush.bf16.msra.mxu0 %v192
  %234 = vmatpush.bf16.msra.mxu0 %v188
  %235 = vmatpush.bf16.msra.mxu0 %v184
  %236 = vmatpush.bf16.msra.mxu0 %v180
  %237 = vmatpush.bf16.msra.mxu0 %v176
  %238 = vmatpush.bf16.msra.mxu0 %v172
  %239 = vmatpush.bf16.msra.mxu0 %v168
  %240 = vmatmul.bf16.gmra.mxu0 %v29
  %v241 = vpop.f32.mrf.mxu0
  %v242 = vadd.f32 %v64, %v241
  %v243 = vpop.f32.mrf.mxu0
  %244 = vdwg.mxu0
  %245 = vmatpush.bf16.msra.mxu0 %v197
  %246 = vmatpush.bf16.msra.mxu0 %v193
  %247 = vmatpush.bf16.msra.mxu0 %v189
  %248 = vmatpush.bf16.msra.mxu0 %v185
  %249 = vmatpush.bf16.msra.mxu0 %v181
  %250 = vmatpush.bf16.msra.mxu0 %v177
  %251 = vmatpush.bf16.msra.mxu0 %v173
  %252 = vmatpush.bf16.msra.mxu0 %v169
  %253 = vmatmul.bf16.gmra.mxu0 %v29
  %v254 = vpop.f32.mrf.mxu0
  %v255 = vadd.f32 %v65, %v254
  %v256 = vpop.f32.mrf.mxu0
  %257 = vdwg.mxu0
  %258 = vmatpush.bf16.msra.mxu0 %v198
  %259 = vmatpush.bf16.msra.mxu0 %v194
  %260 = vmatpush.bf16.msra.mxu0 %v190
  %261 = vmatpush.bf16.msra.mxu0 %v186
  %262 = vmatpush.bf16.msra.mxu0 %v182
  %263 = vmatpush.bf16.msra.mxu0 %v178
  %264 = vmatpush.bf16.msra.mxu0 %v174
  %265 = vmatpush.bf16.msra.mxu0 %v170
  %266 = vmatmul.bf16.gmra.mxu0 %v29
  %v267 = vpop.f32.mrf.mxu0
  %v268 = vadd.f32 %v66, %v267
  %v269 = vpop.f32.mrf.mxu0
  %270 = vdwg.mxu0
  %271 = vmatpush.bf16.msra.mxu0 %v199
  %272 = vmatpush.bf16.msra.mxu0 %v195
  %273 = vmatpush.bf16.msra.mxu0 %v191
  %274 = vmatpush.bf16.msra.mxu0 %v187
  %275 = vmatpush.bf16.msra.mxu0 %v183
  %276 = vmatpush.bf16.msra.mxu0 %v179
  %277 = vmatpush.bf16.msra.mxu0 %v175
  %278 = vmatpush.bf16.msra.mxu0 %v171
  %279 = vmatmul.bf16.gmra.mxu0 %v29
  %v280 = vpop.f32.mrf.mxu0
  %v281 = vadd.f32 %v67, %v280
  %v282 = vpop.f32.mrf.mxu0
  %283 = vdwg.mxu0
  %284 = vst [vmem:[#allocation2] sm:$0xff] %v242
  %285 = vst [vmem:[#allocation2 + $0x8] sm:$0xff] %v255
  %286 = vst [vmem:[#allocation2 + $0x10] sm:$0xff] %v268
  %287 = vst [vmem:[#allocation2 + $0x18] sm:$0xff] %v281
  %288 = vst [vmem:[%s6] sm:$0xff] 0.0
  %v289 = vld [vmem:[%s2] sm:$0xff]
  %v290 = vld [vmem:[%s2 + $0x8] sm:$0xff]
  %v291 = vld [vmem:[%s2 + $0x10] sm:$0xff]
  %v292 = vld [vmem:[%s2 + $0x18] sm:$0xff]
  %v293 = vld [vmem:[%s2 + $0x20] sm:$0xff]
  %v294 = vld [vmem:[%s2 + $0x28] sm:$0xff]
  %v295 = vld [vmem:[%s2 + $0x30] sm:$0xff]
  %v296 = vld [vmem:[%s2 + $0x38] sm:$0xff]
  %v297 = vld [vmem:[%s2 + $0x40] sm:$0xff]
  %v298 = vld [vmem:[%s2 + $0x48] sm:$0xff]
  %v299 = vld [vmem:[%s2 + $0x50] sm:$0xff]
  %v300 = vld [vmem:[%s2 + $0x58] sm:$0xff]
  %v301 = vld [vmem:[%s2 + $0x60] sm:$0xff]
  %v302 = vld [vmem:[%s2 + $0x68] sm:$0xff]
  %v303 = vld [vmem:[%s2 + $0x70] sm:$0xff]
  %v304 = vld [vmem:[%s2 + $0x78] sm:$0xff]
  %v305 = vld [vmem:[%s2 + $0x80] sm:$0xff]
  %v306 = vld [vmem:[%s2 + $0x88] sm:$0xff]
  %v307 = vld [vmem:[%s2 + $0x90] sm:$0xff]
  %v308 = vld [vmem:[%s2 + $0x98] sm:$0xff]
  %v309 = vld [vmem:[%s2 + $0xa0] sm:$0xff]
  %v310 = vld [vmem:[%s2 + $0xa8] sm:$0xff]
  %v311 = vld [vmem:[%s2 + $0xb0] sm:$0xff]
  %v312 = vld [vmem:[%s2 + $0xb8] sm:$0xff]
  %v313 = vld [vmem:[%s2 + $0xc0] sm:$0xff]
  %v314 = vld [vmem:[%s2 + $0xc8] sm:$0xff]
  %v315 = vld [vmem:[%s2 + $0xd0] sm:$0xff]
  %v316 = vld [vmem:[%s2 + $0xd8] sm:$0xff]
  %v317 = vld [vmem:[%s2 + $0xe0] sm:$0xff]
  %v318 = vld [vmem:[%s2 + $0xe8] sm:$0xff]
  %v319 = vld [vmem:[%s2 + $0xf0] sm:$0xff]
  %v320 = vld [vmem:[%s2 + $0xf8] sm:$0xff]
  %v321 = vld [vmem:[%s4] sm:$0x1]
  %v322 = vld [vmem:[%s5] sm:$0x1]
  %v323 = vld [vmem:[#allocation2] ss:$8 sm:$0xf]
  %v324 = vpack.c.bf16 %v321, %v321
  %v357 = vunpack.c.l.b16 %v289
  %v358 = vunpack.c.h.b16 %v289
  %v359 = vunpack.c.l.b16 %v290
  %v360 = vunpack.c.h.b16 %v290
  %v361 = vunpack.c.l.b16 %v291
  %v362 = vunpack.c.h.b16 %v291
  %v363 = vunpack.c.l.b16 %v292
  %v364 = vunpack.c.h.b16 %v292
  %v365 = vunpack.c.l.b16 %v293
  %v366 = vunpack.c.h.b16 %v293
  %v367 = vunpack.c.l.b16 %v294
  %v368 = vunpack.c.h.b16 %v294
  %v369 = vunpack.c.l.b16 %v295
  %v370 = vunpack.c.h.b16 %v295
  %v371 = vunpack.c.l.b16 %v296
  %v372 = vunpack.c.h.b16 %v296
  %v373 = vunpack.c.l.b16 %v297
  %v374 = vunpack.c.h.b16 %v297
  %v375 = vunpack.c.l.b16 %v298
  %v376 = vunpack.c.h.b16 %v298
  %v377 = vunpack.c.l.b16 %v299
  %v378 = vunpack.c.h.b16 %v299
  %v379 = vunpack.c.l.b16 %v300
  %v380 = vunpack.c.h.b16 %v300
  %v381 = vunpack.c.l.b16 %v301
  %v382 = vunpack.c.h.b16 %v301
  %v383 = vunpack.c.l.b16 %v302
  %v384 = vunpack.c.h.b16 %v302
  %v385 = vunpack.c.l.b16 %v303
  %v386 = vunpack.c.h.b16 %v303
  %v387 = vunpack.c.l.b16 %v304
  %v388 = vunpack.c.h.b16 %v304
  %v389 = vunpack.c.l.b16 %v305
  %v390 = vunpack.c.h.b16 %v305
  %v391 = vunpack.c.l.b16 %v306
  %v392 = vunpack.c.h.b16 %v306
  %v393 = vunpack.c.l.b16 %v307
  %v394 = vunpack.c.h.b16 %v307
  %v395 = vunpack.c.l.b16 %v308
  %v396 = vunpack.c.h.b16 %v308
  %v397 = vunpack.c.l.b16 %v309
  %v398 = vunpack.c.h.b16 %v309
  %v399 = vunpack.c.l.b16 %v310
  %v400 = vunpack.c.h.b16 %v310
  %v401 = vunpack.c.l.b16 %v311
  %v402 = vunpack.c.h.b16 %v311
  %v403 = vunpack.c.l.b16 %v312
  %v404 = vunpack.c.h.b16 %v312
  %v405 = vunpack.c.l.b16 %v313
  %v406 = vunpack.c.h.b16 %v313
  %v407 = vunpack.c.l.b16 %v314
  %v408 = vunpack.c.h.b16 %v314
  %v409 = vunpack.c.l.b16 %v315
  %v410 = vunpack.c.h.b16 %v315
  %v411 = vunpack.c.l.b16 %v316
  %v412 = vunpack.c.h.b16 %v316
  %v413 = vunpack.c.l.b16 %v317
  %v414 = vunpack.c.h.b16 %v317
  %v415 = vunpack.c.l.b16 %v318
  %v416 = vunpack.c.h.b16 %v318
  %v417 = vunpack.c.l.b16 %v319
  %v418 = vunpack.c.h.b16 %v319
  %v419 = vunpack.c.l.b16 %v320
  %v420 = vunpack.c.h.b16 %v320
  %v421 = vpack.c.b16 %v361, %v357
  %v422 = vpack.c.b16 %v362, %v358
  %v423 = vpack.c.b16 %v363, %v359
  %v424 = vpack.c.b16 %v364, %v360
  %v425 = vpack.c.b16 %v369, %v365
  %v426 = vpack.c.b16 %v370, %v366
  %v427 = vpack.c.b16 %v371, %v367
  %v428 = vpack.c.b16 %v372, %v368
  %v429 = vpack.c.b16 %v377, %v373
  %v430 = vpack.c.b16 %v378, %v374
  %v431 = vpack.c.b16 %v379, %v375
  %v432 = vpack.c.b16 %v380, %v376
  %v433 = vpack.c.b16 %v385, %v381
  %v434 = vpack.c.b16 %v386, %v382
  %v435 = vpack.c.b16 %v387, %v383
  %v436 = vpack.c.b16 %v388, %v384
  %v437 = vpack.c.b16 %v393, %v389
  %v438 = vpack.c.b16 %v394, %v390
  %v439 = vpack.c.b16 %v395, %v391
  %v440 = vpack.c.b16 %v396, %v392
  %v441 = vpack.c.b16 %v401, %v397
  %v442 = vpack.c.b16 %v402, %v398
  %v443 = vpack.c.b16 %v403, %v399
  %v444 = vpack.c.b16 %v404, %v400
  %v445 = vpack.c.b16 %v409, %v405
  %v446 = vpack.c.b16 %v410, %v406
  %v447 = vpack.c.b16 %v411, %v407
  %v448 = vpack.c.b16 %v412, %v408
  %v449 = vpack.c.b16 %v417, %v413
  %v450 = vpack.c.b16 %v418, %v414
  %v451 = vpack.c.b16 %v419, %v415
  %v452 = vpack.c.b16 %v420, %v416
  %485 = vmatpush.bf16.msra.mxu0 %v449
  %486 = vmatpush.bf16.msra.mxu0 %v445
  %487 = vmatpush.bf16.msra.mxu0 %v441
  %488 = vmatpush.bf16.msra.mxu0 %v437
  %489 = vmatpush.bf16.msra.mxu0 %v433
  %490 = vmatpush.bf16.msra.mxu0 %v429
  %491 = vmatpush.bf16.msra.mxu0 %v425
  %492 = vmatpush.bf16.msra.mxu0 %v421
  %493 = vmatmul.bf16.gmra.mxu0 %v324
  %v494 = vpop.f32.mrf.mxu0
  %v495 = vadd.f32 0.0, %v494
  %v496 = vpop.f32.mrf.mxu0
  %497 = vdwg.mxu0
  %498 = vmatpush.bf16.msra.mxu0 %v450
  %499 = vmatpush.bf16.msra.mxu0 %v446
  %500 = vmatpush.bf16.msra.mxu0 %v442
  %501 = vmatpush.bf16.msra.mxu0 %v438
  %502 = vmatpush.bf16.msra.mxu0 %v434
  %503 = vmatpush.bf16.msra.mxu0 %v430
  %504 = vmatpush.bf16.msra.mxu0 %v426
  %505 = vmatpush.bf16.msra.mxu0 %v422
  %506 = vmatmul.bf16.gmra.mxu0 %v324
  %v507 = vpop.f32.mrf.mxu0
  %v508 = vadd.f32 0.0, %v507
  %v509 = vpop.f32.mrf.mxu0
  %510 = vdwg.mxu0
  %511 = vmatpush.bf16.msra.mxu0 %v451
  %512 = vmatpush.bf16.msra.mxu0 %v447
  %513 = vmatpush.bf16.msra.mxu0 %v443
  %514 = vmatpush.bf16.msra.mxu0 %v439
  %515 = vmatpush.bf16.msra.mxu0 %v435
  %516 = vmatpush.bf16.msra.mxu0 %v431
  %517 = vmatpush.bf16.msra.mxu0 %v427
  %518 = vmatpush.bf16.msra.mxu0 %v423
  %519 = vmatmul.bf16.gmra.mxu0 %v324
  %v520 = vpop.f32.mrf.mxu0
  %v521 = vadd.f32 0.0, %v520
  %v522 = vpop.f32.mrf.mxu0
  %523 = vdwg.mxu0
  %524 = vmatpush.bf16.msra.mxu0 %v452
  %525 = vmatpush.bf16.msra.mxu0 %v448
  %526 = vmatpush.bf16.msra.mxu0 %v444
  %527 = vmatpush.bf16.msra.mxu0 %v440
  %528 = vmatpush.bf16.msra.mxu0 %v436
  %529 = vmatpush.bf16.msra.mxu0 %v432
  %530 = vmatpush.bf16.msra.mxu0 %v428
  %531 = vmatpush.bf16.msra.mxu0 %v424
  %532 = vmatmul.bf16.gmra.mxu0 %v324
  %v533 = vpop.f32.mrf.mxu0
  %v534 = vadd.f32 0.0, %v533
  %v535 = vpop.f32.mrf.mxu0
  %536 = vdwg.mxu0
  %v541 = vrot.slane %v508, 7
  %v542 = vrot.slane %v521, 6
  %v543 = vrot.slane %v534, 5
  %vm544 = vcmask 1040384
  %v545 = vsel %vm544, %v495, %v541
  %vm546 = vcmask 1042434
  %v547 = vsel %vm546, %v542, %v543
  %vm548 = vcmask 1041408
  %v549 = vsel %vm548, %v545, %v547
  %v551 = vadd.f32 %v323, %v549
  %v552 = vxor.u32 %v551, 2147483648
  %v553 = vmul.f32 %v552, 1.442695
  %v554 = vpow.pop %v553
  %v555 = vadd.f32 %v554, 1.0
  %v556 = vrcp.pop %v555
  %v557 = vmul.f32 %v555, %v556
  %v558 = vsub.f32 1.0, %v557
  %v559 = vmul.f32 %v556, %v558
  %v560 = vadd.f32 %v556, %v559
  %vm561 = vweird.f32 %v555
  %vm562 = vweird.f32 %v556
  %vm563 = vmor %vm561, %vm562
  %v564 = vsel %vm563, %v556, %v560
  %v565 = vand.u32 2147483647, %v555
  %vm566 = vcmp.eq.f32.partialorder %v565, 8.507059e+37
  %v567 = vand.u32 %v555, 2147483648
  %v568 = vor.u32 1.1754944e-38, %v567
  %v569 = vsel %vm566, %v568, %v564
  %v570 = vmul.f32 1.0, %v569
  %v572 = vrot.slane %v551, 1
  %v574 = vxor.u32 %v572, 2147483648
  %v575 = vmul.f32 %v574, 1.442695
  %v576 = vpow.pop %v575
  %v577 = vadd.f32 %v576, 1.0
  %v578 = vrcp.pop %v577
  %v579 = vmul.f32 %v577, %v578
  %v580 = vsub.f32 1.0, %v579
  %v581 = vmul.f32 %v578, %v580
  %v582 = vadd.f32 %v578, %v581
  %vm583 = vweird.f32 %v577
  %vm584 = vweird.f32 %v578
  %vm585 = vmor %vm583, %vm584
  %v586 = vsel %vm585, %v578, %v582
  %v587 = vand.u32 2147483647, %v577
  %vm588 = vcmp.eq.f32.partialorder %v587, 8.507059e+37
  %v589 = vand.u32 %v577, 2147483648
  %v590 = vor.u32 1.1754944e-38, %v589
  %v591 = vsel %vm588, %v590, %v586
  %v592 = vmul.f32 1.0, %v591
  %v593 = vrot.slane %v551, 2
  %v595 = vtanh.pop %v593
  %v596 = vrot.slane %v551, 3
  %v598 = vxor.u32 %v596, 2147483648
  %v599 = vmul.f32 %v598, 1.442695
  %v600 = vpow.pop %v599
  %v601 = vadd.f32 %v600, 1.0
  %v602 = vrcp.pop %v601
  %v603 = vmul.f32 %v601, %v602
  %v604 = vsub.f32 1.0, %v603
  %v605 = vmul.f32 %v602, %v604
  %v606 = vadd.f32 %v602, %v605
  %vm607 = vweird.f32 %v601
  %vm608 = vweird.f32 %v602
  %vm609 = vmor %vm607, %vm608
  %v610 = vsel %vm609, %v602, %v606
  %v611 = vand.u32 2147483647, %v601
  %vm612 = vcmp.eq.f32.partialorder %v611, 8.507059e+37
  %v613 = vand.u32 %v601, 2147483648
  %v614 = vor.u32 1.1754944e-38, %v613
  %v615 = vsel %vm612, %v614, %v610
  %v616 = vmul.f32 1.0, %v615
  %v617 = vmul.f32 %v592, %v322
  %v618 = vmul.f32 %v570, %v595
  %v619 = vadd.f32 %v617, %v618
  %v620 = vtanh.pop %v619
  %v621 = vmul.f32 %v616, %v620
  %622 = vst [vmem:[%s6] sm:$0x1] %v621
  %623 = vst [vmem:[%s7] sm:$0x1] %v621
  %624 = vst [vmem:[%s8] sm:$0x1] %v619
  // Predicated region
  $region26: #{decoder_rnn_forward.2} parent=0 // pred_check
    _
  $region27: #{decoder_rnn_forward.2} parent=0 // pred_check_branch
    %626 = sbr.rel (0) target = $region29
  $region28: #{decoder_rnn_forward.2} parent=0 // pred_region
    _
  $region29: #{decoder_rnn_forward.2} parent=0 // pred_fallthru
    _
  // Predicated region
  $region30: #{decoder_rnn_forward.2} parent=0 // pred_check
    _
  $region31: #{decoder_rnn_forward.2} parent=0 // pred_check_branch
    %628 = sbr.rel (0) target = $region33
  $region32: #{decoder_rnn_forward.2} parent=0 // pred_region
    _
  $region33: #{decoder_rnn_forward.2} parent=0 // pred_fallthru
    _
  // Predicated region
  $region34: #{decoder_rnn_forward.2} parent=0 // pred_check
    _
  $region35: #{decoder_rnn_forward.2} parent=0 // pred_check_branch
    %630 = sbr.rel (0) target = $region37
  $region36: #{decoder_rnn_forward.2} parent=0 // pred_region
    _
  $region37: #{decoder_rnn_forward.2} parent=0 // pred_fallthru
    _
  // Predicated region
  $region38: #{decoder_rnn_forward.2} parent=0 // pred_check
    _
  $region39: #{decoder_rnn_forward.2} parent=0 // pred_check_branch
    %632 = sbr.rel (0) target = $region41
  $region40: #{decoder_rnn_forward.2} parent=0 // pred_region
    _
  $region41: #{decoder_rnn_forward.2} parent=0 // pred_fallthru
    _
  // Predicated region
  $region42: #{decoder_rnn_forward.2} parent=0 // pred_check
    _
  $region43: #{decoder_rnn_forward.2} parent=0 // pred_check_branch
    %634 = sbr.rel (0) target = $region45
  $region44: #{decoder_rnn_forward.2} parent=0 // pred_region
    _
  $region45: #{decoder_rnn_forward.2} parent=0 // pred_fallthru
    _
  // Predicated region
  $region46: #{decoder_rnn_forward.2} parent=0 // pred_check
    _
  $region47: #{decoder_rnn_forward.2} parent=0 // pred_check_branch
    %636 = sbr.rel (0) target = $region49
  $region48: #{decoder_rnn_forward.2} parent=0 // pred_region
    _
  $region49: #{decoder_rnn_forward.2} parent=0 // pred_fallthru
    _

</llo_original>
